<compile_context>
chip_gen: v6e
topology: v6e:2x2x1
jax: 0.10.0
libtpu: 0.0.40
codegen_flags: <defaults>
</compile_context>

<pallas_src>
import jax
import jax.numpy as jnp
from jax.experimental import pallas as pl
from jax.experimental.pallas import tpu as pltpu

# Deterministic stand-in for Python's id(self) / self.unique_key.
# (1234567890 rounds identically on the kernel and reference paths for
# float32/bfloat16.)
UNIQUE_KEY = 1234567890

_LANES = 128
_MAX_TILE_BYTES = 16 * 1024 * 1024     # per-output-tile budget
_VMEM_LIMIT_BYTES = 48 * 1024 * 1024   # covers double-buffered 16 MiB tiles
_DUAL_CORE_BYTES = 2 * 1024 * 1024     # above this, force >=2 (even) grid steps


def _cdiv(a, b):
    return -(-a // b)


def _sublane_pack(dtype):
    """Packed-vreg sublane height for a dtype (full-pack => unmasked stores)."""
    itemsize = jnp.dtype(dtype).itemsize
    return {4: 8, 2: 16, 1: 32}.get(itemsize, 8)


def _fill_kernel(key_ref, o_ref):
    # key_ref: (1,) int32 in SMEM (scalar prefetch).  o_ref: VMEM output tile.
    val = key_ref[0].astype(o_ref.dtype)
    o_ref[...] = jnp.full(o_ref.shape, val, dtype=o_ref.dtype)


def _row_blocking(rows, row_bytes, sub, want_two_steps):
    """Pick (block_rows, grid_rows).

    block_rows is a multiple of `sub` (or == rows), its tile stays within
    _MAX_TILE_BYTES, and when `want_two_steps` the step count is >=2 and even
    so v7x's two TensorCores see balanced work.
    """
    if rows <= sub:
        return rows, 1
    max_rows = max(sub, (_MAX_TILE_BYTES // row_bytes) // sub * sub)
    steps = _cdiv(rows, max_rows)
    if want_two_steps:
        steps = max(2, steps)
        steps += steps % 2
    block_rows = _cdiv(_cdiv(rows, steps), sub) * sub
    if block_rows >= rows:
        block_rows = rows
    return block_rows, _cdiv(rows, block_rows)


def opaque_forward(x, *, unique_key=UNIQUE_KEY, shape_infer=None):
    """JAX/Pallas equivalent of Opaque.forward(x).

    shape_infer(x) -> (dtype, shape); defaults to identity shape inference
    (same dtype/shape as the input), mirroring common LBANN opaque usage.
    """
    if shape_infer is None:
        shape_infer = lambda a: (a.dtype, a.shape)
    dtype, shape = shape_infer(x)
    dtype = jnp.dtype(dtype)
    shape = tuple(int(s) for s in shape)

    total = 1
    for s in shape:
        total *= s
    if total == 0:
        # Nothing to fill; no kernel needed.
        return jnp.full(shape, unique_key, dtype=dtype)

    itemsize = dtype.itemsize
    sub = _sublane_pack(dtype)
    total_bytes = total * itemsize
    want_two = total_bytes >= _DUAL_CORE_BYTES

    # Fill value as an SMEM scalar (scalar prefetch): one compiled kernel for
    # all Opaque instances / keys.
    # TODO(synk): a true 64-bit id(self) does not fit int32; it would need two
    # int32 scalars (float output dtypes round it anyway).
    key_arr = jnp.array([unique_key], dtype=jnp.int32)

    if total % _LANES == 0:
        # Lane-dense slab (rows, 128): unmasked full-width stores except for
        # at most one partial edge block; contiguous (no-copy) final reshape.
        rows = total // _LANES
        block_rows, grid_r = _row_blocking(rows, _LANES * itemsize, sub, want_two)
        slab = pl.pallas_call(
            _fill_kernel,
            out_shape=jax.ShapeDtypeStruct((rows, _LANES), dtype),
            grid_spec=pltpu.PrefetchScalarGridSpec(
                num_scalar_prefetch=1,
                grid=(grid_r,),
                in_specs=[],
                out_specs=pl.BlockSpec((block_rows, _LANES), lambda i, key: (i, 0)),
            ),
            compiler_params=pltpu.CompilerParams(
                dimension_semantics=("parallel",),
                vmem_limit_bytes=_VMEM_LIMIT_BYTES,
            ),
        )(key_arr)
        return slab.reshape(shape)

    # Ragged total: write straight into a 2D collapse of the final shape.
    # Edge stores may be masked, but HBM traffic stays at exactly 1x the
    # output size (no padded slab, no extra read+write pass).
    if len(shape) >= 2:
        R, C = total // shape[-1], shape[-1]
    else:
        R, C = 1, total   # 1-D and 0-D (total == 1) collapse to a single row

    if C * itemsize <= _MAX_TILE_BYTES // sub:
        bc, grid_c = C, 1                                   # full lane extent
    else:
        bc = max(_LANES, (_MAX_TILE_BYTES // (sub * itemsize)) // _LANES * _LANES)
        grid_c = _cdiv(C, bc)
    br, grid_r = _row_blocking(R, bc * itemsize, sub, want_two and grid_c == 1)

    out2d = pl.pallas_call(
        _fill_kernel,
        out_shape=jax.ShapeDtypeStruct((R, C), dtype),
        grid_spec=pltpu.PrefetchScalarGridSpec(
            num_scalar_prefetch=1,
            grid=(grid_r, grid_c),
            in_specs=[],
            out_specs=pl.BlockSpec((br, bc), lambda i, j, key: (i, j)),
        ),
        compiler_params=pltpu.CompilerParams(
            dimension_semantics=("parallel", "parallel"),
            vmem_limit_bytes=_VMEM_LIMIT_BYTES,
        ),
    )(key_arr)
    return out2d.reshape(shape)


if __name__ == "__main__":
    key = jax.random.PRNGKey(0)
    # NCHW input (values are irrelevant to Opaque's forward; only shape/dtype
    # matter through shape inference).
    x = jax.random.normal(key, (2, 4, 16, 16), dtype=jnp.float32)

    def shape_infer(a):
        # Identity shape inference: same dtype and shape as the input.
        return jnp.float32, a.shape

    out = opaque_forward(x, shape_infer=shape_infer)
    out = jax.block_until_ready(out)
    expected = jnp.full(x.shape, UNIQUE_KEY, dtype=jnp.float32)
    assert out.shape == x.shape and out.dtype == jnp.float32
    assert bool(jnp.all(out == expected))

    # Ragged (non-multiple-of-128) shape: direct masked-store path.
    y = jnp.zeros((3, 5, 7), dtype=jnp.bfloat16)
    out2 = jax.block_until_ready(
        opaque_forward(y, shape_infer=lambda a: (jnp.bfloat16, a.shape)))
    expected2 = jnp.full(y.shape, UNIQUE_KEY, dtype=jnp.bfloat16)
    assert out2.shape == y.shape and out2.dtype == jnp.bfloat16
    assert bool(jnp.all(out2 == expected2))

    # Larger aligned shape (4 MiB): exercises the multi-step (even grid,
    # dual-TC-friendly) path.
    z = jnp.zeros((1024, 1024), dtype=jnp.float32)
    out3 = jax.block_until_ready(
        opaque_forward(z, shape_infer=lambda a: (jnp.float32, a.shape)))
    expected3 = jnp.full(z.shape, UNIQUE_KEY, dtype=jnp.float32)
    assert out3.shape == z.shape and out3.dtype == jnp.float32
    assert bool(jnp.all(out3 == expected3))

    print("KERNEL_OK")
</pallas_src>

<mosaic_0001>
module attributes {stable_mosaic.version = 11 : i64} {
  func.func @_fill_kernel(%arg0: i32, %arg1: memref<1xi32, #tpu.memory_space<smem>>, %arg2: memref<16x128xf32, #tpu.memory_space<vmem>>) attributes {dimension_semantics = [#tpu.dimension_semantics<parallel>], iteration_bounds = array<i64: 1>, scalar_prefetch = 1 : i64, scratch_operands = 0 : i64, tpu.core_type = #tpu.core_type<tc>, window_params = [{transform_indices = @transform_0, window_bounds = array<i64: 16, 128>}]} {
    %c0 = arith.constant 0 : index
    %0 = memref.load %arg1[%c0] : memref<1xi32, #tpu.memory_space<smem>>
    %1 = arith.sitofp %0 : i32 to f32
    %2 = vector.broadcast %1 : f32 to vector<16x128xf32>
    %c0_0 = arith.constant 0 : index
    %c0_1 = arith.constant 0 : index
    %3 = vector.load %arg2[%c0_0, %c0_1] : memref<16x128xf32, #tpu.memory_space<vmem>>, vector<16x128xf32>
    tpu.vector_store %arg2[%c0_0, %c0_1], %2 {strides = array<i32>} : memref<16x128xf32, #tpu.memory_space<vmem>>, vector<16x128xf32>,
    return
  }
  func.func @transform_0(%arg0: i32, %arg1: memref<1xi32, #tpu.memory_space<smem>>) -> (i32, i32) {
    %c0_i32 = arith.constant 0 : i32
    %c0_i32_0 = arith.constant 0 : i32
    return %arg0, %c0_i32 : i32, i32
  }
}

</mosaic_0001>

<llo_original>
// kernel: tpu_custom_call.1
$region0: #{tpu_custom_call.1}
  #allocation0 [shape = 'u32[]', space=smem, size = 0x4, offset = 0x4, fixed_abs, tag = 'smem constant byte address 0x4 - core index']
  #allocation1 [shape = 'u32[144,128]{1,0:T(1,128)}', space=vmem, size = 0x12000, scoped, tag = 'internal scratch']
  #allocation2 [shape = 's32[1]{0}', space=sflag, size = 0x4, scoped, tag = 'scoped memory for tpu_custom_call.1']
  #allocation3 [shape = 's32[1]{0:T(128)S(6)}', space=smem, size = 0x200, scoped, tag = 'prefetched SMEM operand 0']
  %s0 = inlined_call_operand.<no memory space> [shape: s32[1], index: 0, kind: input, shape index: {}]
  %s1 = inlined_call_operand.hbm [shape: f32[16,128], index: 1, kind: output, shape index: {}]
  %s2 = sld [smem:[#allocation0]]
  $region10: #{tpu_custom_call.1} parent=0
    _
  %s4 = ssub.s32 1, %s2
  %s5 = scalar_select 0, %s4, %s2
  %6 = sst [smem:[#allocation3]] %s0
  $region1: #{tpu_custom_call.1} parent=0
    #allocation4 [shape = 'u8[8192]{0}', space=vmem, size = 0x2000, scoped, tag = 'output window, operand 0, single buffered']
    #allocation5 [shape = 's32[1]{0}', space=sflag, size = 0x4, scoped, tag = 'scoped memory for tpu_custom_call.1']
    %7 = vsyncpa [#allocation5], 0
    %s8 = sld [smem:[#allocation3]]
    %s9 = scvt.s32.f32 %s8
    %v10 = vstv %s9
    %11 = vst [vmem:[#allocation4] sm:$0xff] %v10
    %12 = vst [vmem:[#allocation4 + $0x8] sm:$0xff] %v10
    // Predicated region
    $region2: #{tpu_custom_call.1} parent=1 // pred_check
      _
    $region3: #{tpu_custom_call.1} parent=1 // pred_check_branch
      %14 = sbr.rel (0) target = $region5
    $region4: #{tpu_custom_call.1} parent=1 // pred_region
      %s16 = ssub.s32 256, 256
      %17 = vsyncadd [#allocation5], %s16
      %s18 = sshll.u32 [#allocation4], 4
      %s19 = int_to_ptr.vmem [resolvable:$true] %s18
      %24 = dma.vmem_to_hbm [thread:$0]  %s19, 256, %s1, [#allocation5], 128, 128, 8
    $region5: #{tpu_custom_call.1} parent=1 // pred_fallthru
      _
    // Predicated region
    $region6: #{tpu_custom_call.1} parent=1 // pred_check
      _
    $region7: #{tpu_custom_call.1} parent=1 // pred_check_branch
      %26 = sbr.rel (0) target = $region9
    $region8: #{tpu_custom_call.1} parent=1 // pred_region
      %27 = dma.done [#allocation5], 256
    $region9: #{tpu_custom_call.1} parent=1 // pred_fallthru
      _
    %28 = vsyncpa [#allocation5], 1

</llo_original>
